<compile_context>
chip_gen: v7x
topology: tpu7x:2x2x1
jax: 0.10.0
libtpu: 0.0.40
codegen_flags: <defaults>
</compile_context>

<pallas_src>
import math

import jax
import jax.numpy as jnp
from jax.experimental import pallas as pl
from jax.experimental.pallas import tpu as pltpu


def _mlp_kernel(x_ref,
                w1_ref, b1_ref,
                w2_ref, b2_ref,
                w3_ref, b3_ref,
                w4_ref, b4_ref,
                o_ref):
    # Feature-major: activations are (features, batch_tile) with the batch on lanes.
    h = x_ref[...]                                                       # (state, tm) bf16

    # hidden layer 1 + ReLU (f32 accumulation / elementwise, bf16 back into the MXU)
    h = jnp.dot(w1_ref[...], h, preferred_element_type=jnp.float32) + b1_ref[...]
    h = jnp.maximum(h, 0.0).astype(w2_ref.dtype)

    # hidden layer 2 + ReLU
    h = jnp.dot(w2_ref[...], h, preferred_element_type=jnp.float32) + b2_ref[...]
    h = jnp.maximum(h, 0.0).astype(w3_ref.dtype)

    # hidden layer 3 + ReLU
    h = jnp.dot(w3_ref[...], h, preferred_element_type=jnp.float32) + b3_ref[...]
    h = jnp.maximum(h, 0.0).astype(w4_ref.dtype)

    # output layer (no activation)
    # TODO(synk): if a bundle dump shows the MXU idle-waiting on this 16->4 layer, replace
    # it with 16 broadcast-multiply-adds on the (otherwise idle) VPU slots.
    out = jnp.dot(w4_ref[...], h, preferred_element_type=jnp.float32) + b4_ref[...]
    o_ref[...] = out.astype(o_ref.dtype)


def _round_up(n, m):
    return ((n + m - 1) // m) * m


def _pick_batch_tile(batch, tile_m):
    # Small batches: a single full-array block (block dim == array dim is always valid).
    if batch <= 128:
        return batch
    # Otherwise tiles must be lane-aligned (multiple of 128).  Aim for >= 2 grid steps so
    # both v7x TensorCores get work; cap at tile_m (per-step overhead / VMEM sweet spot).
    half = _round_up(pl.cdiv(batch, 2), 128)
    return max(128, min(tile_m, half))


def fully_connected_brain(x, params, *, tile_m=8192, compute_dtype=jnp.bfloat16):
    """x: (batch, state_size). params: list of (W(out,in), b(out,1)) tuples (PyTorch layout)."""
    batch, state_size = x.shape
    action_size = params[-1][0].shape[0]

    tm = _pick_batch_tile(batch, tile_m)
    grid = (pl.cdiv(batch, tm),)

    # Weights go to bf16 for the MXU; biases stay f32 (added to the f32 accumulator).
    flat = []
    for w, b in params:
        flat.extend([w.astype(compute_dtype), b.astype(jnp.float32)])

    # Feature-major input: transpose once in the wrapper, batch lands on the lane axis.
    xt = x.T.astype(compute_dtype)                                   # (state_size, batch)

    x_spec = pl.BlockSpec((state_size, tm), lambda i: (0, i))
    out_spec = pl.BlockSpec((action_size, tm), lambda i: (0, i))
    # Weights/biases: constant block index -> resident in VMEM, no per-step re-DMA.
    w_specs = [pl.BlockSpec(a.shape, lambda i: (0, 0)) for a in flat]

    sizes = [state_size] + [w.shape[0] for w, _ in params]
    flops = 2 * batch * sum(a * b for a, b in zip(sizes[:-1], sizes[1:]))
    bytes_accessed = (batch * state_size * xt.dtype.itemsize
                      + batch * action_size * x.dtype.itemsize
                      + sum(int(a.size) * a.dtype.itemsize for a in flat))

    out_t = pl.pallas_call(
        _mlp_kernel,
        out_shape=jax.ShapeDtypeStruct((action_size, batch), x.dtype),
        grid=grid,
        in_specs=[x_spec] + w_specs,
        out_specs=out_spec,
        compiler_params=pltpu.CompilerParams(
            dimension_semantics=("parallel",),  # shards grid steps across v7x's 2 TCs
        ),
        cost_estimate=pl.CostEstimate(
            flops=flops, transcendentals=0, bytes_accessed=bytes_accessed),
    )(xt, *flat)
    return out_t.T                                                   # (batch, action_size)


def init_params(key, state_size, action_size, hidden_sizes=(32, 32, 16)):
    """Deterministic PyTorch-style (uniform +/- 1/sqrt(fan_in)) Linear init.

    Weights use nn.Linear layout (out, in); biases are stored (out, 1) so they broadcast
    across the lane (batch) axis inside the kernel.
    """
    sizes = [state_size] + list(hidden_sizes) + [action_size]
    params = []
    for fan_in, fan_out in zip(sizes[:-1], sizes[1:]):
        key, kw, kb = jax.random.split(key, 3)
        bound = 1.0 / math.sqrt(fan_in)
        w = jax.random.uniform(kw, (fan_out, fan_in), jnp.float32, -bound, bound)
        b = jax.random.uniform(kb, (fan_out, 1), jnp.float32, -bound, bound)
        params.append((w, b))
    return params


def reference_forward(x, params):
    """Pure-JAX f32 reference with PyTorch semantics: h = relu(h @ W.T + b)."""
    h = x
    for w, b in params[:-1]:
        h = jnp.maximum(h @ w.T + b.T, 0.0)
    w, b = params[-1]
    return h @ w.T + b.T


if __name__ == "__main__":
    key = jax.random.PRNGKey(0)
    batch, state_size, action_size = 2, 8, 4

    key, kx = jax.random.split(key)
    x = jax.random.normal(kx, (batch, state_size), jnp.float32)

    params = init_params(key, state_size, action_size, hidden_sizes=(32, 32, 16))

    # Small-batch path (single full-array block, feature-major).
    out = jax.block_until_ready(fully_connected_brain(x, params))
    ref = reference_forward(x, params)
    assert out.shape == (batch, action_size)
    # bf16 MXU operands with f32 accumulation -> loosened tolerance vs the f32 reference.
    assert jnp.allclose(out, ref, atol=5e-2, rtol=5e-2), "mismatch vs reference (small batch)"

    # Tiled-grid path with a partial last tile (exercises lane-tile streaming + clipping
    # and the >=2-grid-step path used for v7x dual-TC sharding).
    key, kx2 = jax.random.split(key)
    big_batch = 2 * 2048 + 12
    x_big = jax.random.normal(kx2, (big_batch, state_size), jnp.float32)
    out_big = jax.block_until_ready(fully_connected_brain(x_big, params))
    ref_big = reference_forward(x_big, params)
    assert out_big.shape == (big_batch, action_size)
    assert jnp.allclose(out_big, ref_big, atol=5e-2, rtol=5e-2), "mismatch vs reference (tiled batch)"

    print("KERNEL_OK")
</pallas_src>

<mosaic_0001>
module attributes {stable_mosaic.version = 11 : i64} {
  func.func @_mlp_kernel(%arg0: i32, %arg1: memref<8x2xbf16, #tpu.memory_space<vmem>>, %arg2: memref<32x8xbf16, #tpu.memory_space<vmem>>, %arg3: memref<32x1xf32, #tpu.memory_space<vmem>>, %arg4: memref<32x32xbf16, #tpu.memory_space<vmem>>, %arg5: memref<32x1xf32, #tpu.memory_space<vmem>>, %arg6: memref<16x32xbf16, #tpu.memory_space<vmem>>, %arg7: memref<16x1xf32, #tpu.memory_space<vmem>>, %arg8: memref<4x16xbf16, #tpu.memory_space<vmem>>, %arg9: memref<4x1xf32, #tpu.memory_space<vmem>>, %arg10: memref<4x2xf32, #tpu.memory_space<vmem>>) attributes {dimension_semantics = [#tpu.dimension_semantics<parallel>], iteration_bounds = array<i64: 1>, scalar_prefetch = 0 : i64, scratch_operands = 0 : i64, tpu.core_type = #tpu.core_type<tc>, window_params = [{transform_indices = @transform_0, window_bounds = array<i64: 8, 2>}, {pipeline_mode = #tpu.pipeline_mode<synchronous>, transform_indices = @transform_1, window_bounds = array<i64: 32, 8>}, {pipeline_mode = #tpu.pipeline_mode<synchronous>, transform_indices = @transform_2, window_bounds = array<i64: 32, 1>}, {pipeline_mode = #tpu.pipeline_mode<synchronous>, transform_indices = @transform_3, window_bounds = array<i64: 32, 32>}, {pipeline_mode = #tpu.pipeline_mode<synchronous>, transform_indices = @transform_4, window_bounds = array<i64: 32, 1>}, {pipeline_mode = #tpu.pipeline_mode<synchronous>, transform_indices = @transform_5, window_bounds = array<i64: 16, 32>}, {pipeline_mode = #tpu.pipeline_mode<synchronous>, transform_indices = @transform_6, window_bounds = array<i64: 16, 1>}, {pipeline_mode = #tpu.pipeline_mode<synchronous>, transform_indices = @transform_7, window_bounds = array<i64: 4, 16>}, {pipeline_mode = #tpu.pipeline_mode<synchronous>, transform_indices = @transform_8, window_bounds = array<i64: 4, 1>}, {transform_indices = @transform_9, window_bounds = array<i64: 4, 2>}]} {
    %c0 = arith.constant 0 : index
    %c0_0 = arith.constant 0 : index
    %0 = vector.load %arg1[%c0, %c0_0] : memref<8x2xbf16, #tpu.memory_space<vmem>>, vector<8x2xbf16>
    %c0_1 = arith.constant 0 : index
    %c0_2 = arith.constant 0 : index
    %1 = vector.load %arg2[%c0_1, %c0_2] : memref<32x8xbf16, #tpu.memory_space<vmem>>, vector<32x8xbf16>
    %cst = arith.constant dense<0.000000e+00> : vector<32x2xf32>
    %2 = tpu.matmul %1, %0, %cst {dimension_numbers = #tpu.dot_dimension_numbers<[1], [0], [0], [1], [0, 0, 1, 1], [], []>} : vector<32x8xbf16>, vector<8x2xbf16>, vector<32x2xf32> -> vector<32x2xf32>
    %c0_3 = arith.constant 0 : index
    %c0_4 = arith.constant 0 : index
    %3 = vector.load %arg3[%c0_3, %c0_4] : memref<32x1xf32, #tpu.memory_space<vmem>>, vector<32x1xf32>
    %4 = vector.broadcast %3 : vector<32x1xf32> to vector<32x2xf32>
    %5 = arith.addf %2, %4 : vector<32x2xf32>
    %cst_5 = arith.constant 0.000000e+00 : f32
    %6 = vector.broadcast %cst_5 : f32 to vector<32x2xf32>
    %7 = arith.maximumf %5, %6 : vector<32x2xf32>
    %8 = arith.truncf %7 : vector<32x2xf32> to vector<32x2xbf16>
    %c0_6 = arith.constant 0 : index
    %c0_7 = arith.constant 0 : index
    %9 = vector.load %arg4[%c0_6, %c0_7] : memref<32x32xbf16, #tpu.memory_space<vmem>>, vector<32x32xbf16>
    %cst_8 = arith.constant dense<0.000000e+00> : vector<32x2xf32>
    %10 = tpu.matmul %9, %8, %cst_8 {dimension_numbers = #tpu.dot_dimension_numbers<[1], [0], [0], [1], [0, 0, 1, 1], [], []>} : vector<32x32xbf16>, vector<32x2xbf16>, vector<32x2xf32> -> vector<32x2xf32>
    %c0_9 = arith.constant 0 : index
    %c0_10 = arith.constant 0 : index
    %11 = vector.load %arg5[%c0_9, %c0_10] : memref<32x1xf32, #tpu.memory_space<vmem>>, vector<32x1xf32>
    %12 = vector.broadcast %11 : vector<32x1xf32> to vector<32x2xf32>
    %13 = arith.addf %10, %12 : vector<32x2xf32>
    %cst_11 = arith.constant 0.000000e+00 : f32
    %14 = vector.broadcast %cst_11 : f32 to vector<32x2xf32>
    %15 = arith.maximumf %13, %14 : vector<32x2xf32>
    %16 = arith.truncf %15 : vector<32x2xf32> to vector<32x2xbf16>
    %c0_12 = arith.constant 0 : index
    %c0_13 = arith.constant 0 : index
    %17 = vector.load %arg6[%c0_12, %c0_13] : memref<16x32xbf16, #tpu.memory_space<vmem>>, vector<16x32xbf16>
    %cst_14 = arith.constant dense<0.000000e+00> : vector<16x2xf32>
    %18 = tpu.matmul %17, %16, %cst_14 {dimension_numbers = #tpu.dot_dimension_numbers<[1], [0], [0], [1], [0, 0, 1, 1], [], []>} : vector<16x32xbf16>, vector<32x2xbf16>, vector<16x2xf32> -> vector<16x2xf32>
    %c0_15 = arith.constant 0 : index
    %c0_16 = arith.constant 0 : index
    %19 = vector.load %arg7[%c0_15, %c0_16] : memref<16x1xf32, #tpu.memory_space<vmem>>, vector<16x1xf32>
    %20 = vector.broadcast %19 : vector<16x1xf32> to vector<16x2xf32>
    %21 = arith.addf %18, %20 : vector<16x2xf32>
    %cst_17 = arith.constant 0.000000e+00 : f32
    %22 = vector.broadcast %cst_17 : f32 to vector<16x2xf32>
    %23 = arith.maximumf %21, %22 : vector<16x2xf32>
    %24 = arith.truncf %23 : vector<16x2xf32> to vector<16x2xbf16>
    %c0_18 = arith.constant 0 : index
    %c0_19 = arith.constant 0 : index
    %25 = vector.load %arg8[%c0_18, %c0_19] : memref<4x16xbf16, #tpu.memory_space<vmem>>, vector<4x16xbf16>
    %cst_20 = arith.constant dense<0.000000e+00> : vector<4x2xf32>
    %26 = tpu.matmul %25, %24, %cst_20 {dimension_numbers = #tpu.dot_dimension_numbers<[1], [0], [0], [1], [0, 0, 1, 1], [], []>} : vector<4x16xbf16>, vector<16x2xbf16>, vector<4x2xf32> -> vector<4x2xf32>
    %c0_21 = arith.constant 0 : index
    %c0_22 = arith.constant 0 : index
    %27 = vector.load %arg9[%c0_21, %c0_22] : memref<4x1xf32, #tpu.memory_space<vmem>>, vector<4x1xf32>
    %28 = vector.broadcast %27 : vector<4x1xf32> to vector<4x2xf32>
    %29 = arith.addf %26, %28 : vector<4x2xf32>
    %c0_23 = arith.constant 0 : index
    %c0_24 = arith.constant 0 : index
    %30 = vector.load %arg10[%c0_23, %c0_24] : memref<4x2xf32, #tpu.memory_space<vmem>>, vector<4x2xf32>
    tpu.vector_store %arg10[%c0_23, %c0_24], %29 {strides = array<i32>} : memref<4x2xf32, #tpu.memory_space<vmem>>, vector<4x2xf32>,
    return
  }
  func.func @transform_0(%arg0: i32) -> (i32, i32) {
    %c0_i32 = arith.constant 0 : i32
    %c0_i32_0 = arith.constant 0 : i32
    return %c0_i32, %arg0 : i32, i32
  }
  func.func @transform_1(%arg0: i32) -> (i32, i32) {
    %c0_i32 = arith.constant 0 : i32
    %c0_i32_0 = arith.constant 0 : i32
    %c0_i32_1 = arith.constant 0 : i32
    return %c0_i32, %c0_i32_0 : i32, i32
  }
  func.func @transform_2(%arg0: i32) -> (i32, i32) {
    %c0_i32 = arith.constant 0 : i32
    %c0_i32_0 = arith.constant 0 : i32
    %c0_i32_1 = arith.constant 0 : i32
    return %c0_i32, %c0_i32_0 : i32, i32
  }
  func.func @transform_3(%arg0: i32) -> (i32, i32) {
    %c0_i32 = arith.constant 0 : i32
    %c0_i32_0 = arith.constant 0 : i32
    %c0_i32_1 = arith.constant 0 : i32
    return %c0_i32, %c0_i32_0 : i32, i32
  }
  func.func @transform_4(%arg0: i32) -> (i32, i32) {
    %c0_i32 = arith.constant 0 : i32
    %c0_i32_0 = arith.constant 0 : i32
    %c0_i32_1 = arith.constant 0 : i32
    return %c0_i32, %c0_i32_0 : i32, i32
  }
  func.func @transform_5(%arg0: i32) -> (i32, i32) {
    %c0_i32 = arith.constant 0 : i32
    %c0_i32_0 = arith.constant 0 : i32
    %c0_i32_1 = arith.constant 0 : i32
    return %c0_i32, %c0_i32_0 : i32, i32
  }
  func.func @transform_6(%arg0: i32) -> (i32, i32) {
    %c0_i32 = arith.constant 0 : i32
    %c0_i32_0 = arith.constant 0 : i32
    %c0_i32_1 = arith.constant 0 : i32
    return %c0_i32, %c0_i32_0 : i32, i32
  }
  func.func @transform_7(%arg0: i32) -> (i32, i32) {
    %c0_i32 = arith.constant 0 : i32
    %c0_i32_0 = arith.constant 0 : i32
    %c0_i32_1 = arith.constant 0 : i32
    return %c0_i32, %c0_i32_0 : i32, i32
  }
  func.func @transform_8(%arg0: i32) -> (i32, i32) {
    %c0_i32 = arith.constant 0 : i32
    %c0_i32_0 = arith.constant 0 : i32
    %c0_i32_1 = arith.constant 0 : i32
    return %c0_i32, %c0_i32_0 : i32, i32
  }
  func.func @transform_9(%arg0: i32) -> (i32, i32) {
    %c0_i32 = arith.constant 0 : i32
    %c0_i32_0 = arith.constant 0 : i32
    return %c0_i32, %arg0 : i32, i32
  }
}

</mosaic_0001>

<llo_original>
// kernel: tpu_custom_call.1
$region0: #{tpu_custom_call.1}
  #allocation0 [shape = 'u32[]', space=smem, size = 0x4, offset = 0x4, fixed_abs, tag = 'smem constant byte address 0x4 - core index']
  #allocation1 [shape = 'u32[144,128]{1,0:T(1,128)}', space=vmem, size = 0x12000, scoped, tag = 'internal scratch']
  %s0 = inlined_call_operand.vmem [shape: bf16[8,2], index: 0, kind: input, shape index: {}]
  %s1 = inlined_call_operand.vmem [shape: bf16[32,8], index: 1, kind: input, shape index: {}]
  %s2 = inlined_call_operand.vmem [shape: f32[32,1], index: 2, kind: input, shape index: {}]
  %s3 = inlined_call_operand.vmem [shape: bf16[32,32], index: 3, kind: input, shape index: {}]
  %s4 = inlined_call_operand.vmem [shape: f32[32,1], index: 4, kind: input, shape index: {}]
  %s5 = inlined_call_operand.vmem [shape: bf16[16,32], index: 5, kind: input, shape index: {}]
  %s6 = inlined_call_operand.vmem [shape: f32[16,1], index: 6, kind: input, shape index: {}]
  %s7 = inlined_call_operand.vmem [shape: bf16[4,16], index: 7, kind: input, shape index: {}]
  %s8 = inlined_call_operand.vmem [shape: f32[4,1], index: 8, kind: input, shape index: {}]
  %s9 = inlined_call_operand.vmem [shape: f32[4,2], index: 9, kind: output, shape index: {}]
  %s10 = sld [smem:[#allocation0]]
  $region46: #{tpu_custom_call.1} parent=0
    _
  %s12 = ssub.s32 1, %s10
  %s13 = scalar_select 0, %s12, %s10
  // Predicated region
  $region2: #{tpu_custom_call.1} parent=0 // pred_check
    _
  $region3: #{tpu_custom_call.1} parent=0 // pred_check_branch
    %15 = sbr.rel (0) target = $region5
  $region4: #{tpu_custom_call.1} parent=0 // pred_region
    _
  $region5: #{tpu_custom_call.1} parent=0 // pred_fallthru
    _
  // Predicated region
  $region6: #{tpu_custom_call.1} parent=0 // pred_check
    _
  $region7: #{tpu_custom_call.1} parent=0 // pred_check_branch
    %17 = sbr.rel (0) target = $region9
  $region8: #{tpu_custom_call.1} parent=0 // pred_region
    _
  $region9: #{tpu_custom_call.1} parent=0 // pred_fallthru
    _
  // Predicated region
  $region10: #{tpu_custom_call.1} parent=0 // pred_check
    _
  $region11: #{tpu_custom_call.1} parent=0 // pred_check_branch
    %19 = sbr.rel (0) target = $region13
  $region12: #{tpu_custom_call.1} parent=0 // pred_region
    _
  $region13: #{tpu_custom_call.1} parent=0 // pred_fallthru
    _
  // Predicated region
  $region14: #{tpu_custom_call.1} parent=0 // pred_check
    _
  $region15: #{tpu_custom_call.1} parent=0 // pred_check_branch
    %21 = sbr.rel (0) target = $region17
  $region16: #{tpu_custom_call.1} parent=0 // pred_region
    _
  $region17: #{tpu_custom_call.1} parent=0 // pred_fallthru
    _
  // Predicated region
  $region18: #{tpu_custom_call.1} parent=0 // pred_check
    _
  $region19: #{tpu_custom_call.1} parent=0 // pred_check_branch
    %23 = sbr.rel (0) target = $region21
  $region20: #{tpu_custom_call.1} parent=0 // pred_region
    _
  $region21: #{tpu_custom_call.1} parent=0 // pred_fallthru
    _
  // Predicated region
  $region22: #{tpu_custom_call.1} parent=0 // pred_check
    _
  $region23: #{tpu_custom_call.1} parent=0 // pred_check_branch
    %25 = sbr.rel (0) target = $region25
  $region24: #{tpu_custom_call.1} parent=0 // pred_region
    _
  $region25: #{tpu_custom_call.1} parent=0 // pred_fallthru
    _
  // Predicated region
  $region26: #{tpu_custom_call.1} parent=0 // pred_check
    _
  $region27: #{tpu_custom_call.1} parent=0 // pred_check_branch
    %27 = sbr.rel (0) target = $region29
  $region28: #{tpu_custom_call.1} parent=0 // pred_region
    _
  $region29: #{tpu_custom_call.1} parent=0 // pred_fallthru
    _
  // Predicated region
  $region30: #{tpu_custom_call.1} parent=0 // pred_check
    _
  $region31: #{tpu_custom_call.1} parent=0 // pred_check_branch
    %29 = sbr.rel (0) target = $region33
  $region32: #{tpu_custom_call.1} parent=0 // pred_region
    _
  $region33: #{tpu_custom_call.1} parent=0 // pred_fallthru
    _
  // Predicated region
  $region34: #{tpu_custom_call.1} parent=0 // pred_check
    _
  $region35: #{tpu_custom_call.1} parent=0 // pred_check_branch
    %31 = sbr.rel (0) target = $region37
  $region36: #{tpu_custom_call.1} parent=0 // pred_region
    _
  $region37: #{tpu_custom_call.1} parent=0 // pred_fallthru
    _
  %v33 = vld [vmem:[%s0] sm:$0xf]
  %v34 = vld [vmem:[%s1] sm:$0xf]
  %v35 = vld [vmem:[%s1 + $0x4] sm:$0xf]
  %v36 = vld [vmem:[%s1 + $0x8] sm:$0xf]
  %v37 = vld [vmem:[%s1 + $0xc] sm:$0xf]
  %v38 = vld [vmem:[%s2] sm:$0xff]
  %v39 = vld [vmem:[%s2 + $0x8] sm:$0xff]
  %v40 = vld [vmem:[%s2 + $0x10] sm:$0xff]
  %v41 = vld [vmem:[%s2 + $0x18] sm:$0xff]
  %43 = vset.pattern.permute.xlu0 0
  %44 = vperm.xlu0 %43, %v38
  %v45 = vpop.permute.xlu0 %44
  %48 = vset.pattern.permute.xlu0 0
  %49 = vperm.xlu0 %48, %v39
  %v50 = vpop.permute.xlu0 %49
  %53 = vset.pattern.permute.xlu0 0
  %54 = vperm.xlu0 %53, %v40
  %v55 = vpop.permute.xlu0 %54
  %58 = vset.pattern.permute.xlu0 0
  %59 = vperm.xlu0 %58, %v41
  %v60 = vpop.permute.xlu0 %59
  %v66 = vunpack.c.l.b16 %v34
  %v67 = vunpack.c.l.b16 %v35
  %v68 = vunpack.c.l.b16 %v36
  %v69 = vunpack.c.l.b16 %v37
  %v70 = vpack.c.b16 %v67, %v66
  %v71 = vpack.c.b16 %v69, %v68
  %vm72 = vcmask 64512
  %v74 = vsel %vm72, %v70, 0
  %v77 = vsel %vm72, %v71, 0
  %vm79 = vcmask 1043456
  %v81 = vsel %vm79, %v33, 0
  %83 = vmatprep.subr.bf16.mxu0 0
  %84 = vmatpush1.bf16.msra.mxu0 %v81
  %85 = vmatprep.subr.bf16.mxu0 0
  %86 = vmatpush1.bf16.msra.mxu0 0
  %87 = vmatprep.subr.bf16.mxu0 0
  %88 = vmatpush1.bf16.msra.mxu0 0
  %89 = vmatprep.subr.bf16.mxu0 0
  %90 = vmatpush1.bf16.msra.mxu0 0
  %91 = vmatprep.subr.bf16.mxu0 0
  %92 = vmatpush1.bf16.msra.mxu0 0
  %93 = vmatprep.subr.bf16.mxu0 0
  %94 = vmatpush1.bf16.msra.mxu0 0
  %95 = vmatprep.subr.bf16.mxu0 0
  %96 = vmatpush1.bf16.msra.mxu0 0
  %97 = vmatprep.subr.bf16.mxu0 0
  %98 = vmatpush1.bf16.msra.mxu0 0
  %99 = vmatprep.subr.bf16.mxu0 0
  %100 = vmatpush1.bf16.msra.mxu0 0
  %101 = vmatprep.subr.bf16.mxu0 0
  %102 = vmatpush1.bf16.msra.mxu0 0
  %103 = vmatprep.subr.bf16.mxu0 0
  %104 = vmatpush1.bf16.msra.mxu0 0
  %105 = vmatprep.subr.bf16.mxu0 0
  %106 = vmatpush1.bf16.msra.mxu0 0
  %107 = vmatprep.subr.bf16.mxu0 0
  %108 = vmatpush1.bf16.msra.mxu0 0
  %109 = vmatprep.subr.bf16.mxu0 0
  %110 = vmatpush1.bf16.msra.mxu0 0
  %111 = vmatprep.subr.bf16.mxu0 0
  %112 = vmatpush1.bf16.msra.mxu0 0
  %113 = vmatprep.subr.bf16.mxu0 0
  %114 = vmatpush1.bf16.msra.mxu0 0
  %115 = vmatprep.mubr.bf16.mxu0 0
  %116 = vmatmul.mubr.bf16.gmra.mrb[0].mxu0 %v74
  %v117 = vpop.f32.mrb[0].mxu0
  %v118 = vadd.f32 %v45, %v117
  %v119 = vpop.f32.mrb[0].mxu0
  %v120 = vpop.f32.mrb[0].mxu0
  %v121 = vadd.f32 %v50, %v120
  %v122 = vpop.f32.mrb[0].mxu0
  %123 = vmatprep.mubr.bf16.mxu0 0
  %124 = vmatmul.mubr.bf16.gmra.mrb[0].mxu0 %v77
  %v125 = vpop.f32.mrb[0].mxu0
  %v126 = vadd.f32 %v55, %v125
  %v127 = vpop.f32.mrb[0].mxu0
  %v128 = vpop.f32.mrb[0].mxu0
  %v129 = vadd.f32 %v60, %v128
  %v130 = vpop.f32.mrb[0].mxu0
  %131 = vdwg.mxu0
  %v132 = vmax.f32 %v118, 0.0
  %v133 = vmax.f32 %v121, 0.0
  %v134 = vmax.f32 %v126, 0.0
  %v135 = vmax.f32 %v129, 0.0
  %v136 = vpack.c.bf16 %v133, %v132
  %v137 = vpack.c.bf16 %v135, %v134
  %v138 = vld [vmem:[%s3] sm:$0xf]
  %v139 = vld [vmem:[%s3 + $0x4] sm:$0xf]
  %v140 = vld [vmem:[%s3 + $0x8] sm:$0xf]
  %v141 = vld [vmem:[%s3 + $0xc] sm:$0xf]
  %v142 = vld [vmem:[%s4] sm:$0xff]
  %v143 = vld [vmem:[%s4 + $0x8] sm:$0xff]
  %v144 = vld [vmem:[%s4 + $0x10] sm:$0xff]
  %v145 = vld [vmem:[%s4 + $0x18] sm:$0xff]
  %147 = vset.pattern.permute.xlu0 0
  %148 = vperm.xlu0 %147, %v142
  %v149 = vpop.permute.xlu0 %148
  %152 = vset.pattern.permute.xlu0 0
  %153 = vperm.xlu0 %152, %v143
  %v154 = vpop.permute.xlu0 %153
  %157 = vset.pattern.permute.xlu0 0
  %158 = vperm.xlu0 %157, %v144
  %v159 = vpop.permute.xlu0 %158
  %162 = vset.pattern.permute.xlu0 0
  %163 = vperm.xlu0 %162, %v145
  %v164 = vpop.permute.xlu0 %163
  %v170 = vunpack.c.l.b16 %v138
  %v171 = vunpack.c.l.b16 %v139
  %v172 = vunpack.c.l.b16 %v140
  %v173 = vunpack.c.l.b16 %v141
  %v174 = vpack.c.b16 %v171, %v170
  %v175 = vpack.c.b16 %v173, %v172
  %vm176 = vcmask 261120
  %v178 = vsel %vm176, %v174, 0
  %v181 = vsel %vm176, %v175, 0
  %183 = vmatprep.subr.bf16.mxu0 0
  %184 = vmatpush1.bf16.msra.mxu0 %v136
  %185 = vmatprep.subr.bf16.mxu0 0
  %186 = vmatpush1.bf16.msra.mxu0 %v137
  %187 = vmatprep.subr.bf16.mxu0 0
  %188 = vmatpush1.bf16.msra.mxu0 0
  %189 = vmatprep.subr.bf16.mxu0 0
  %190 = vmatpush1.bf16.msra.mxu0 0
  %191 = vmatprep.subr.bf16.mxu0 0
  %192 = vmatpush1.bf16.msra.mxu0 0
  %193 = vmatprep.subr.bf16.mxu0 0
  %194 = vmatpush1.bf16.msra.mxu0 0
  %195 = vmatprep.subr.bf16.mxu0 0
  %196 = vmatpush1.bf16.msra.mxu0 0
  %197 = vmatprep.subr.bf16.mxu0 0
  %198 = vmatpush1.bf16.msra.mxu0 0
  %199 = vmatprep.subr.bf16.mxu0 0
  %200 = vmatpush1.bf16.msra.mxu0 0
  %201 = vmatprep.subr.bf16.mxu0 0
  %202 = vmatpush1.bf16.msra.mxu0 0
  %203 = vmatprep.subr.bf16.mxu0 0
  %204 = vmatpush1.bf16.msra.mxu0 0
  %205 = vmatprep.subr.bf16.mxu0 0
  %206 = vmatpush1.bf16.msra.mxu0 0
  %207 = vmatprep.subr.bf16.mxu0 0
  %208 = vmatpush1.bf16.msra.mxu0 0
  %209 = vmatprep.subr.bf16.mxu0 0
  %210 = vmatpush1.bf16.msra.mxu0 0
  %211 = vmatprep.subr.bf16.mxu0 0
  %212 = vmatpush1.bf16.msra.mxu0 0
  %213 = vmatprep.subr.bf16.mxu0 0
  %214 = vmatpush1.bf16.msra.mxu0 0
  %215 = vmatprep.mubr.bf16.mxu0 0
  %216 = vmatmul.mubr.bf16.gmra.mrb[0].mxu0 %v178
  %v217 = vpop.f32.mrb[0].mxu0
  %v218 = vadd.f32 %v149, %v217
  %v219 = vpop.f32.mrb[0].mxu0
  %v220 = vpop.f32.mrb[0].mxu0
  %v221 = vadd.f32 %v154, %v220
  %v222 = vpop.f32.mrb[0].mxu0
  %223 = vmatprep.mubr.bf16.mxu0 0
  %224 = vmatmul.mubr.bf16.gmra.mrb[0].mxu0 %v181
  %v225 = vpop.f32.mrb[0].mxu0
  %v226 = vadd.f32 %v159, %v225
  %v227 = vpop.f32.mrb[0].mxu0
  %v228 = vpop.f32.mrb[0].mxu0
  %v229 = vadd.f32 %v164, %v228
  %v230 = vpop.f32.mrb[0].mxu0
  %231 = vdwg.mxu0
  %v232 = vmax.f32 %v218, 0.0
  %v233 = vmax.f32 %v221, 0.0
  %v234 = vmax.f32 %v226, 0.0
  %v235 = vmax.f32 %v229, 0.0
  %v236 = vpack.c.bf16 %v233, %v232
  %v237 = vpack.c.bf16 %v235, %v234
  %v238 = vld [vmem:[%s5] sm:$0xf]
  %v239 = vld [vmem:[%s5 + $0x4] sm:$0xf]
  %v240 = vld [vmem:[%s6] sm:$0xff]
  %v241 = vld [vmem:[%s6 + $0x8] sm:$0xff]
  %243 = vset.pattern.permute.xlu0 0
  %244 = vperm.xlu0 %243, %v240
  %v245 = vpop.permute.xlu0 %244
  %248 = vset.pattern.permute.xlu0 0
  %249 = vperm.xlu0 %248, %v241
  %v250 = vpop.permute.xlu0 %249
  %v254 = vunpack.c.l.b16 %v238
  %v255 = vunpack.c.l.b16 %v239
  %v256 = vpack.c.b16 %v255, %v254
  %v258 = vsel %vm176, %v256, 0
  %260 = vmatprep.subr.bf16.mxu0 0
  %261 = vmatpush1.bf16.msra.mxu0 %v236
  %262 = vmatprep.subr.bf16.mxu0 0
  %263 = vmatpush1.bf16.msra.mxu0 %v237
  %264 = vmatprep.subr.bf16.mxu0 0
  %265 = vmatpush1.bf16.msra.mxu0 0
  %266 = vmatprep.subr.bf16.mxu0 0
  %267 = vmatpush1.bf16.msra.mxu0 0
  %268 = vmatprep.subr.bf16.mxu0 0
  %269 = vmatpush1.bf16.msra.mxu0 0
  %270 = vmatprep.subr.bf16.mxu0 0
  %271 = vmatpush1.bf16.msra.mxu0 0
  %272 = vmatprep.subr.bf16.mxu0 0
  %273 = vmatpush1.bf16.msra.mxu0 0
  %274 = vmatprep.subr.bf16.mxu0 0
  %275 = vmatpush1.bf16.msra.mxu0 0
  %276 = vmatprep.subr.bf16.mxu0 0
  %277 = vmatpush1.bf16.msra.mxu0 0
  %278 = vmatprep.subr.bf16.mxu0 0
  %279 = vmatpush1.bf16.msra.mxu0 0
  %280 = vmatprep.subr.bf16.mxu0 0
  %281 = vmatpush1.bf16.msra.mxu0 0
  %282 = vmatprep.subr.bf16.mxu0 0
  %283 = vmatpush1.bf16.msra.mxu0 0
  %284 = vmatprep.subr.bf16.mxu0 0
  %285 = vmatpush1.bf16.msra.mxu0 0
  %286 = vmatprep.subr.bf16.mxu0 0
  %287 = vmatpush1.bf16.msra.mxu0 0
  %288 = vmatprep.subr.bf16.mxu0 0
  %289 = vmatpush1.bf16.msra.mxu0 0
  %290 = vmatprep.subr.bf16.mxu0 0
  %291 = vmatpush1.bf16.msra.mxu0 0
  %292 = vmatprep.mubr.bf16.mxu0 0
  %293 = vmatmul.mubr.bf16.gmra.mrb[0].mxu0 %v258
  %v294 = vpop.f32.mrb[0].mxu0
  %v295 = vadd.f32 %v245, %v294
  %v296 = vpop.f32.mrb[0].mxu0
  %v297 = vpop.f32.mrb[0].mxu0
  %v298 = vadd.f32 %v250, %v297
  %v299 = vpop.f32.mrb[0].mxu0
  %300 = vdwg.mxu0
  %v301 = vmax.f32 %v295, 0.0
  %v302 = vmax.f32 %v298, 0.0
  %v303 = vpack.c.bf16 %v302, %v301
  %v304 = vld [vmem:[%s7] sm:$0x3]
  %v305 = vld [vmem:[%s8] sm:$0xf]
  %307 = vset.pattern.permute.xlu0 0
  %308 = vperm.xlu0 %307, %v305
  %v309 = vpop.permute.xlu0 %308
  %vm311 = vcmask 130048
  %v313 = vsel %vm311, %v304, 0
  %315 = vmatprep.subr.bf16.mxu0 0
  %316 = vmatpush1.bf16.msra.mxu0 %v303
  %317 = vmatprep.subr.bf16.mxu0 0
  %318 = vmatpush1.bf16.msra.mxu0 0
  %319 = vmatprep.subr.bf16.mxu0 0
  %320 = vmatpush1.bf16.msra.mxu0 0
  %321 = vmatprep.subr.bf16.mxu0 0
  %322 = vmatpush1.bf16.msra.mxu0 0
  %323 = vmatprep.subr.bf16.mxu0 0
  %324 = vmatpush1.bf16.msra.mxu0 0
  %325 = vmatprep.subr.bf16.mxu0 0
  %326 = vmatpush1.bf16.msra.mxu0 0
  %327 = vmatprep.subr.bf16.mxu0 0
  %328 = vmatpush1.bf16.msra.mxu0 0
  %329 = vmatprep.subr.bf16.mxu0 0
  %330 = vmatpush1.bf16.msra.mxu0 0
  %331 = vmatprep.subr.bf16.mxu0 0
  %332 = vmatpush1.bf16.msra.mxu0 0
  %333 = vmatprep.subr.bf16.mxu0 0
  %334 = vmatpush1.bf16.msra.mxu0 0
  %335 = vmatprep.subr.bf16.mxu0 0
  %336 = vmatpush1.bf16.msra.mxu0 0
  %337 = vmatprep.subr.bf16.mxu0 0
  %338 = vmatpush1.bf16.msra.mxu0 0
  %339 = vmatprep.subr.bf16.mxu0 0
  %340 = vmatpush1.bf16.msra.mxu0 0
  %341 = vmatprep.subr.bf16.mxu0 0
  %342 = vmatpush1.bf16.msra.mxu0 0
  %343 = vmatprep.subr.bf16.mxu0 0
  %344 = vmatpush1.bf16.msra.mxu0 0
  %345 = vmatprep.subr.bf16.mxu0 0
  %346 = vmatpush1.bf16.msra.mxu0 0
  %347 = vmatprep.mubr.bf16.mxu0 0
  %348 = vmatmul.mubr.bf16.gmra.mrb[0].mxu0 %v313
  %v349 = vpop.f32.mrb[0].mxu0
  %v350 = vadd.f32 %v309, %v349
  %v351 = vpop.f32.mrb[0].mxu0
  %v352 = vpop.f32.mrb[0].mxu0
  %v353 = vpop.f32.mrb[0].mxu0
  %354 = vdwg.mxu0
  %vm355 = vcmask 11264
  %356 = vst.msk [vmem:[%s9] sm:$0xf] %vm355, %v350
  // Predicated region
  $region38: #{tpu_custom_call.1} parent=0 // pred_check
    _
  $region39: #{tpu_custom_call.1} parent=0 // pred_check_branch
    %358 = sbr.rel (0) target = $region41
  $region40: #{tpu_custom_call.1} parent=0 // pred_region
    _
  $region41: #{tpu_custom_call.1} parent=0 // pred_fallthru
    _
  // Predicated region
  $region42: #{tpu_custom_call.1} parent=0 // pred_check
    _
  $region43: #{tpu_custom_call.1} parent=0 // pred_check_branch
    %360 = sbr.rel (0) target = $region45
  $region44: #{tpu_custom_call.1} parent=0 // pred_region
    _
  $region45: #{tpu_custom_call.1} parent=0 // pred_fallthru
    _

</llo_original>
